<compile_context>
chip_gen: v6e
topology: v6e:2x2x1
jax: 0.10.0
libtpu: 0.0.40
codegen_flags: <defaults>
</compile_context>

<pallas_src>
import functools

import jax
import jax.numpy as jnp
from jax.experimental import pallas as pl
from jax.experimental.pallas import tpu as pltpu

_LANE = 128


# ------------------------------ helpers --------------------------------------
def _round_up(v, m):
    return ((v + m - 1) // m) * m


def _pad2(x, rows, cols):
    return jnp.pad(x, ((0, rows - x.shape[0]), (0, cols - x.shape[1])))


def _pick_tiles(n):
    """Return (tm, tk, n_pad): dst-row tile, src-contraction tile, padded N."""
    if n <= 128:
        return 128, 128, 128
    n_pad = _round_up(n, 256)              # pad to lcm(tm, tk) = 256, not 512
    tm = 256 if n_pad >= 512 else 128      # >= 2 row tiles -> both v7x TCs busy
    tk = 512 if n_pad % 512 == 0 else 256
    return tm, tk, n_pad


def _vmem_limit_bytes(buffered_elems, scratch_elems=0):
    """Explicit scoped-VMEM limit sized from the chosen tiles (f32 upper bound,
    double-buffered inputs/outputs, 4x headroom), kept below v7x physical."""
    footprint = 4 * (2 * buffered_elems + scratch_elems)
    return int(min(64 << 20, max(8 << 20, 4 * footprint)))


# ----------------------------- Pallas kernels ---------------------------------
def _proj_kernel(x_ref, w_ref, b1_ref, b2_ref, mask_ref, o_ref):
    """packed = x @ [W_self | W_agg] + [b_self | 0] + mask * [b_agg | 0]."""
    xw = jnp.dot(x_ref[...], w_ref[...], preferred_element_type=jnp.float32)
    out = xw + b1_ref[...] + mask_ref[...] * b2_ref[...]
    o_ref[...] = out.astype(o_ref.dtype)


def _agg_kernel(a_ref, src_ref, self_ref, o_ref, acc_ref, *, apply_relu):
    """out(i) = relu?( wh1(i) + sum_k A(i,k) @ xw2(k) ) — pure A-streaming GEMM."""
    k = pl.program_id(1)

    @pl.when(k == 0)
    def _init():
        # Initialise the accumulator with the precomputed self term so the
        # epilogue is just a cast/ReLU (no serialized finalize matmul).
        acc_ref[...] = self_ref[...].astype(jnp.float32)

    acc_ref[...] += jnp.dot(a_ref[...], src_ref[...],
                            preferred_element_type=jnp.float32)

    @pl.when(k == pl.num_programs(1) - 1)
    def _finalize():
        out = acc_ref[...]
        if apply_relu:
            out = jnp.maximum(out, 0.0)
        o_ref[...] = out.astype(o_ref.dtype)


# ----------------------------- layer wrappers ---------------------------------
def _project(x_p, w_cat, b1_cat, b2_cat, mask_p, *, tm, out_dtype):
    """Hoisted projection: one pass over the node rows, full-F contraction."""
    n_pad, f_pad = x_p.shape
    two_h = w_cat.shape[1]
    buffered = (tm * f_pad + f_pad * two_h + 2 * two_h + tm + tm * two_h)

    return pl.pallas_call(
        _proj_kernel,
        out_shape=jax.ShapeDtypeStruct((n_pad, two_h), out_dtype),
        grid_spec=pltpu.PrefetchScalarGridSpec(
            num_scalar_prefetch=0,
            grid=(n_pad // tm,),
            in_specs=[
                pl.BlockSpec((tm, f_pad), lambda i: (i, 0)),      # x row panel
                pl.BlockSpec((f_pad, two_h), lambda i: (0, 0)),   # [W1 | W2]
                pl.BlockSpec((1, two_h), lambda i: (0, 0)),       # [b1 | 0]
                pl.BlockSpec((1, two_h), lambda i: (0, 0)),       # [b2 | 0]
                pl.BlockSpec((tm, 1), lambda i: (i, 0)),          # in-deg mask
            ],
            out_specs=pl.BlockSpec((tm, two_h), lambda i: (i, 0)),
        ),
        compiler_params=pltpu.CompilerParams(
            dimension_semantics=("parallel",),
            vmem_limit_bytes=_vmem_limit_bytes(buffered)),
    )(x_p, w_cat, b1_cat, b2_cat, mask_p)


def _aggregate(a_p, packed, *, tm, tk, h_pad, apply_relu, out_dtype):
    """Tiled A_norm @ xw2 with the self term folded into the accumulator init."""
    n_pad = a_p.shape[0]
    buffered = tm * tk + tk * h_pad + tm * h_pad + tm * h_pad
    scratch = tm * h_pad
    kernel = functools.partial(_agg_kernel, apply_relu=apply_relu)

    # `packed` is passed twice: once as the (tk, H) source stream (xw2 half,
    # column block 1) and once as the (tm, H) destination self term (wh1 half,
    # column block 0).  Both wh1 and the output are k-invariant.
    return pl.pallas_call(
        kernel,
        out_shape=jax.ShapeDtypeStruct((n_pad, h_pad), out_dtype),
        grid_spec=pltpu.PrefetchScalarGridSpec(
            num_scalar_prefetch=0,
            grid=(n_pad // tm, n_pad // tk),
            in_specs=[
                pl.BlockSpec((tm, tk), lambda i, k: (i, k)),      # A_norm tile
                pl.BlockSpec((tk, h_pad), lambda i, k: (k, 1)),   # xw2 (src)
                pl.BlockSpec((tm, h_pad), lambda i, k: (i, 0)),   # wh1 (dst)
            ],
            out_specs=pl.BlockSpec((tm, h_pad), lambda i, k: (i, 0)),
            scratch_shapes=[pltpu.VMEM((tm, h_pad), jnp.float32)],
        ),
        compiler_params=pltpu.CompilerParams(
            dimension_semantics=("parallel", "arbitrary"),
            vmem_limit_bytes=_vmem_limit_bytes(buffered, scratch)),
    )(a_p, packed, packed)


def sage_conv_layer(x_p, a_p, mask_p, w_self, b_self, w_agg, b_agg, *,
                    tm, tk, apply_relu, compute_dtype, out_dtype):
    """One SAGEConv layer (+ optional fused ReLU) on padded inputs."""
    h_pad = w_self.shape[1]
    # Pack the two projections into one (F, 2H) GEMM: doubles MXU lane
    # occupancy on v6e/v7x (H pads to 128 lanes); the two column halves are
    # addressed later purely via BlockSpec column-block indices (no split copy).
    w_cat = jnp.concatenate([w_self, w_agg], axis=1).astype(compute_dtype)
    zeros_b = jnp.zeros_like(b_self)
    b1_cat = jnp.concatenate([b_self, zeros_b], axis=1)   # f32 biases
    b2_cat = jnp.concatenate([b_agg, zeros_b], axis=1)    # masked per dst row

    packed = _project(x_p, w_cat, b1_cat, b2_cat, mask_p, tm=tm,
                      out_dtype=compute_dtype)
    return _aggregate(a_p, packed, tm=tm, tk=tk, h_pad=h_pad,
                      apply_relu=apply_relu, out_dtype=out_dtype)


# ------------------------------ model glue ------------------------------------
def glorot(key, fan_in, fan_out):
    limit = jnp.sqrt(6.0 / (fan_in + fan_out))
    return jax.random.uniform(key, (fan_in, fan_out), jnp.float32, -limit, limit)


def build_adjacency(edge_index, num_nodes):
    """edge_index: int32 (2, E). Row-normalized dense A and in-degree mask."""
    src, dst = edge_index[0], edge_index[1]
    a = jnp.zeros((num_nodes, num_nodes), jnp.float32)
    a = a.at[dst, src].add(1.0)                       # counts multi-edges
    deg = a.sum(axis=1, keepdims=True)                # in-degree per dst node
    mask = (deg > 0).astype(jnp.float32)              # (N, 1)
    a_norm = a / jnp.maximum(deg, 1.0)                # scatter-'mean' weights
    return a_norm, mask


def graphsage_forward(params, x, edge_index, *, is_class=False, residual=False,
                      compute_dtype=jnp.float32):
    n, f = x.shape
    hidden = params["w1_1"].shape[1]
    classes = params["w2_1"].shape[1]

    a_norm, mask = build_adjacency(edge_index, n)

    tm, tk, n_pad = _pick_tiles(n)
    f_pad = _round_up(f, _LANE)
    h_pad = _round_up(hidden, _LANE)
    c_pad = _round_up(classes, _LANE)

    xp = _pad2(x, n_pad, f_pad).astype(compute_dtype)
    # Dense A is materialised once in the compute dtype and reused by both
    # layers (dominant O(N^2) HBM object).
    ap = _pad2(a_norm, n_pad, n_pad).astype(compute_dtype)
    mp = _pad2(mask, n_pad, 1)                               # stays f32

    w11 = _pad2(params["w1_1"], f_pad, h_pad)
    w12 = _pad2(params["w1_2"], f_pad, h_pad)
    b11 = _pad2(params["b1_1"], 1, h_pad)
    b12 = _pad2(params["b1_2"], 1, h_pad)
    w21 = _pad2(params["w2_1"], h_pad, c_pad)
    w22 = _pad2(params["w2_2"], h_pad, c_pad)
    b21 = _pad2(params["b2_1"], 1, c_pad)
    b22 = _pad2(params["b2_2"], 1, c_pad)

    # conv1 + fused ReLU; dropout is identity in eval mode.
    h = sage_conv_layer(xp, ap, mp, w11, b11, w12, b12, tm=tm, tk=tk,
                        apply_relu=True, compute_dtype=compute_dtype,
                        out_dtype=compute_dtype)
    # conv2 (final output kept in f32).
    out_p = sage_conv_layer(h, ap, mp, w21, b21, w22, b22, tm=tm, tk=tk,
                            apply_relu=False, compute_dtype=compute_dtype,
                            out_dtype=jnp.float32)
    out = out_p[:n, :classes]

    if is_class:
        return jax.nn.log_softmax(out, axis=1)
    if residual:
        # Mirrors the PyTorch module's `x += inp`: only valid when
        # classes == features (untested otherwise, as in the original module).
        out = out + x.astype(out.dtype)
    return out


# ------------------------------ reference -------------------------------------
def graphsage_reference(params, x, edge_index, compute_dtype=jnp.float32):
    """Pure-jnp reference (eval mode), mirroring the kernel's dtype casts."""
    a_norm, mask = build_adjacency(edge_index, x.shape[0])
    a = a_norm.astype(compute_dtype)
    cast = lambda v: v.astype(compute_dtype)

    def layer(xx, w_self, b_self, w_agg, b_agg, relu, out_dtype):
        xx = cast(xx)
        wh1 = (jnp.dot(xx, cast(w_self), preferred_element_type=jnp.float32)
               + b_self + mask * b_agg).astype(compute_dtype)
        xw2 = jnp.dot(xx, cast(w_agg),
                      preferred_element_type=jnp.float32).astype(compute_dtype)
        out = wh1.astype(jnp.float32) + jnp.dot(
            a, xw2, preferred_element_type=jnp.float32)
        if relu:
            out = jnp.maximum(out, 0.0)
        return out.astype(out_dtype)

    h = layer(x, params["w1_1"], params["b1_1"], params["w1_2"],
              params["b1_2"], relu=True, out_dtype=compute_dtype)
    return layer(h, params["w2_1"], params["b2_1"], params["w2_2"],
                 params["b2_2"], relu=False, out_dtype=jnp.float32)


# --------------------------------- main ----------------------------------------
if __name__ == "__main__":
    key = jax.random.PRNGKey(0)
    k = jax.random.split(key, 12)

    num_nodes = 8
    num_node_features = 16
    num_hidden = 32
    num_classes = 8
    num_edges = 16

    params = {
        "w1_1": glorot(k[0], num_node_features, num_hidden),
        "w1_2": glorot(k[1], num_node_features, num_hidden),
        "b1_1": 0.1 * jax.random.normal(k[2], (1, num_hidden), jnp.float32),
        "b1_2": 0.1 * jax.random.normal(k[3], (1, num_hidden), jnp.float32),
        "w2_1": glorot(k[4], num_hidden, num_classes),
        "w2_2": glorot(k[5], num_hidden, num_classes),
        "b2_1": 0.1 * jax.random.normal(k[6], (1, num_classes), jnp.float32),
        "b2_2": 0.1 * jax.random.normal(k[7], (1, num_classes), jnp.float32),
    }

    x = jax.random.normal(k[8], (num_nodes, num_node_features), jnp.float32)
    src = jax.random.randint(k[9], (num_edges,), 0, num_nodes, jnp.int32)
    dst = jax.random.randint(k[10], (num_edges,), 0, num_nodes, jnp.int32)
    edge_index = jnp.stack([src, dst], axis=0)        # (2, E)

    # f32 path: tight correctness check against the pure-jnp reference.
    out_f32 = jax.block_until_ready(
        graphsage_forward(params, x, edge_index, compute_dtype=jnp.float32))
    ref_f32 = graphsage_reference(params, x, edge_index, jnp.float32)
    assert out_f32.shape == (num_nodes, num_classes)
    assert jnp.allclose(out_f32, ref_f32, atol=1e-4, rtol=1e-4), "f32 mismatch"

    # bf16 path (halves the dominant O(N^2) adjacency HBM stream; f32 MXU
    # accumulation), checked against a reference applying the same casts.
    out_bf16 = jax.block_until_ready(
        graphsage_forward(params, x, edge_index, compute_dtype=jnp.bfloat16))
    ref_bf16 = graphsage_reference(params, x, edge_index, jnp.bfloat16)
    assert jnp.allclose(out_bf16, ref_bf16, atol=3e-2, rtol=3e-2), "bf16 mismatch"

    print("KERNEL_OK")
</pallas_src>

<mosaic_0001>
module attributes {stable_mosaic.version = 11 : i64} {
  func.func @_proj_kernel(%arg0: i32, %arg1: memref<128x128xf32, #tpu.memory_space<vmem>>, %arg2: memref<128x256xf32, #tpu.memory_space<vmem>>, %arg3: memref<1x256xf32, #tpu.memory_space<vmem>>, %arg4: memref<1x256xf32, #tpu.memory_space<vmem>>, %arg5: memref<128x1xf32, #tpu.memory_space<vmem>>, %arg6: memref<128x256xf32, #tpu.memory_space<vmem>>) attributes {dimension_semantics = [#tpu.dimension_semantics<parallel>], iteration_bounds = array<i64: 1>, scalar_prefetch = 0 : i64, scratch_operands = 0 : i64, tpu.core_type = #tpu.core_type<tc>, window_params = [{transform_indices = @transform_0, window_bounds = array<i64: 128, 128>}, {pipeline_mode = #tpu.pipeline_mode<synchronous>, transform_indices = @transform_1, window_bounds = array<i64: 128, 256>}, {pipeline_mode = #tpu.pipeline_mode<synchronous>, transform_indices = @transform_2, window_bounds = array<i64: 1, 256>}, {pipeline_mode = #tpu.pipeline_mode<synchronous>, transform_indices = @transform_3, window_bounds = array<i64: 1, 256>}, {transform_indices = @transform_4, window_bounds = array<i64: 128, 1>}, {transform_indices = @transform_5, window_bounds = array<i64: 128, 256>}]} {
    %c0 = arith.constant 0 : index
    %c0_0 = arith.constant 0 : index
    %0 = vector.load %arg1[%c0, %c0_0] : memref<128x128xf32, #tpu.memory_space<vmem>>, vector<128x128xf32>
    %c0_1 = arith.constant 0 : index
    %c0_2 = arith.constant 0 : index
    %1 = vector.load %arg2[%c0_1, %c0_2] : memref<128x256xf32, #tpu.memory_space<vmem>>, vector<128x256xf32>
    %cst = arith.constant dense<0.000000e+00> : vector<128x256xf32>
    %2 = tpu.matmul %0, %1, %cst {dimension_numbers = #tpu.dot_dimension_numbers<[1], [0], [0], [1], [0, 0, 1, 1], [], []>} : vector<128x128xf32>, vector<128x256xf32>, vector<128x256xf32> -> vector<128x256xf32>
    %c0_3 = arith.constant 0 : index
    %c0_4 = arith.constant 0 : index
    %3 = vector.load %arg3[%c0_3, %c0_4] : memref<1x256xf32, #tpu.memory_space<vmem>>, vector<1x256xf32>
    %4 = vector.broadcast %3 : vector<1x256xf32> to vector<128x256xf32>
    %5 = arith.addf %2, %4 : vector<128x256xf32>
    %c0_5 = arith.constant 0 : index
    %c0_6 = arith.constant 0 : index
    %6 = vector.load %arg5[%c0_5, %c0_6] : memref<128x1xf32, #tpu.memory_space<vmem>>, vector<128x1xf32>
    %c0_7 = arith.constant 0 : index
    %c0_8 = arith.constant 0 : index
    %7 = vector.load %arg4[%c0_7, %c0_8] : memref<1x256xf32, #tpu.memory_space<vmem>>, vector<1x256xf32>
    %8 = vector.broadcast %6 : vector<128x1xf32> to vector<128x256xf32>
    %9 = vector.broadcast %7 : vector<1x256xf32> to vector<128x256xf32>
    %10 = arith.mulf %8, %9 : vector<128x256xf32>
    %11 = arith.addf %5, %10 : vector<128x256xf32>
    %c0_9 = arith.constant 0 : index
    %c0_10 = arith.constant 0 : index
    %12 = vector.load %arg6[%c0_9, %c0_10] : memref<128x256xf32, #tpu.memory_space<vmem>>, vector<128x256xf32>
    tpu.vector_store %arg6[%c0_9, %c0_10], %11 {strides = array<i32>} : memref<128x256xf32, #tpu.memory_space<vmem>>, vector<128x256xf32>,
    return
  }
  func.func @transform_0(%arg0: i32) -> (i32, i32) {
    %c0_i32 = arith.constant 0 : i32
    %c0_i32_0 = arith.constant 0 : i32
    return %arg0, %c0_i32 : i32, i32
  }
  func.func @transform_1(%arg0: i32) -> (i32, i32) {
    %c0_i32 = arith.constant 0 : i32
    %c0_i32_0 = arith.constant 0 : i32
    %c0_i32_1 = arith.constant 0 : i32
    return %c0_i32, %c0_i32_0 : i32, i32
  }
  func.func @transform_2(%arg0: i32) -> (i32, i32) {
    %c0_i32 = arith.constant 0 : i32
    %c0_i32_0 = arith.constant 0 : i32
    %c0_i32_1 = arith.constant 0 : i32
    return %c0_i32, %c0_i32_0 : i32, i32
  }
  func.func @transform_3(%arg0: i32) -> (i32, i32) {
    %c0_i32 = arith.constant 0 : i32
    %c0_i32_0 = arith.constant 0 : i32
    %c0_i32_1 = arith.constant 0 : i32
    return %c0_i32, %c0_i32_0 : i32, i32
  }
  func.func @transform_4(%arg0: i32) -> (i32, i32) {
    %c0_i32 = arith.constant 0 : i32
    %c0_i32_0 = arith.constant 0 : i32
    return %arg0, %c0_i32 : i32, i32
  }
  func.func @transform_5(%arg0: i32) -> (i32, i32) {
    %c0_i32 = arith.constant 0 : i32
    %c0_i32_0 = arith.constant 0 : i32
    return %arg0, %c0_i32 : i32, i32
  }
}

</mosaic_0001>

<llo_original>
// kernel: tpu_custom_call.1
$region0: #{tpu_custom_call.1}
  #allocation0 [shape = 'u32[]', space=smem, size = 0x4, offset = 0x4, fixed_abs, tag = 'smem constant byte address 0x4 - core index']
  #allocation1 [shape = 'u32[144,128]{1,0:T(1,128)}', space=vmem, size = 0x12000, scoped, tag = 'internal scratch']
  %s0 = inlined_call_operand.vmem [shape: f32[128,128], index: 0, kind: input, shape index: {}]
  %s1 = inlined_call_operand.hbm [shape: f32[128,256], index: 1, kind: input, shape index: {}]
  %s2 = inlined_call_operand.vmem [shape: f32[1,256], index: 2, kind: input, shape index: {}]
  %s3 = inlined_call_operand.vmem [shape: f32[1,256], index: 3, kind: input, shape index: {}]
  %s4 = inlined_call_operand.vmem [shape: f32[128,1], index: 4, kind: input, shape index: {}]
  %s5 = inlined_call_operand.hbm [shape: f32[128,256], index: 5, kind: output, shape index: {}]
  %s6 = sld [smem:[#allocation0]]
  $region34: #{tpu_custom_call.1} parent=0
    _
  %s8 = ssub.s32 1, %s6
  %s9 = scalar_select 0, %s8, %s6
  $region1: #{tpu_custom_call.1} parent=0
    #allocation2 [shape = 'u8[131072]{0}', space=vmem, size = 0x20000, scoped, tag = 'input window, operand 1, single buffered']
    #allocation3 [shape = 's32[1]{0}', space=sflag, size = 0x4, scoped, tag = 'scoped memory for tpu_custom_call.1']
    #allocation4 [shape = 's32[1]{0}', space=sflag, size = 0x4, scoped, tag = 'scoped memory for tpu_custom_call.1']
    #allocation5 [shape = 'u8[131072]{0}', space=vmem, size = 0x20000, scoped, tag = 'output window, operand 0, single buffered']
    %10 = vsyncpa [#allocation3], 0
    %11 = vsyncpa [#allocation4], 0
    // Predicated region
    $region2: #{tpu_custom_call.1} parent=1 // pred_check
      _
    $region3: #{tpu_custom_call.1} parent=1 // pred_check_branch
      %13 = sbr.rel (0) target = $region5
    $region4: #{tpu_custom_call.1} parent=1 // pred_region
      _
    $region5: #{tpu_custom_call.1} parent=1 // pred_fallthru
      _
    // Predicated region
    $region6: #{tpu_custom_call.1} parent=1 // pred_check
      _
    $region7: #{tpu_custom_call.1} parent=1 // pred_check_branch
      %15 = sbr.rel (0) target = $region9
    $region8: #{tpu_custom_call.1} parent=1 // pred_region
      %s17 = ssub.s32 4096, 4096
      %18 = vsyncadd [#allocation3], %s17
      %s19 = sshll.u32 [#allocation2], 4
      %s20 = int_to_ptr.vmem [resolvable:$true] %s19
      %25 = dma.hbm_to_vmem [thread:$0]  %s1, 4096, %s20, [#allocation3], 256, 256, 16
    $region9: #{tpu_custom_call.1} parent=1 // pred_fallthru
      _
    // Predicated region
    $region10: #{tpu_custom_call.1} parent=1 // pred_check
      _
    $region11: #{tpu_custom_call.1} parent=1 // pred_check_branch
      %27 = sbr.rel (0) target = $region13
    $region12: #{tpu_custom_call.1} parent=1 // pred_region
      _
    $region13: #{tpu_custom_call.1} parent=1 // pred_fallthru
      _
    // Predicated region
    $region14: #{tpu_custom_call.1} parent=1 // pred_check
      _
    $region15: #{tpu_custom_call.1} parent=1 // pred_check_branch
      %29 = sbr.rel (0) target = $region17
    $region16: #{tpu_custom_call.1} parent=1 // pred_region
      _
    $region17: #{tpu_custom_call.1} parent=1 // pred_fallthru
      _
    // Predicated region
    $region18: #{tpu_custom_call.1} parent=1 // pred_check
      _
    $region19: #{tpu_custom_call.1} parent=1 // pred_check_branch
      %31 = sbr.rel (0) target = $region21
    $region20: #{tpu_custom_call.1} parent=1 // pred_region
      _
    $region21: #{tpu_custom_call.1} parent=1 // pred_fallthru
      _
    // Predicated region
    $region22: #{tpu_custom_call.1} parent=1 // pred_check
      _
    $region23: #{tpu_custom_call.1} parent=1 // pred_check_branch
      %33 = sbr.rel (0) target = $region25
    $region24: #{tpu_custom_call.1} parent=1 // pred_region
      %34 = dma.done [#allocation3], 4096
    $region25: #{tpu_custom_call.1} parent=1 // pred_fallthru
      _
    %v35 = vld [vmem:[%s0] sm:$0xff]
    %v36 = vld [vmem:[%s0 + $0x8] sm:$0xff]
    %v37 = vld [vmem:[%s0 + $0x10] sm:$0xff]
    %v38 = vld [vmem:[%s0 + $0x18] sm:$0xff]
    %v39 = vld [vmem:[%s0 + $0x20] sm:$0xff]
    %v40 = vld [vmem:[%s0 + $0x28] sm:$0xff]
    %v41 = vld [vmem:[%s0 + $0x30] sm:$0xff]
    %v42 = vld [vmem:[%s0 + $0x38] sm:$0xff]
    %v43 = vld [vmem:[%s0 + $0x40] sm:$0xff]
    %v44 = vld [vmem:[%s0 + $0x48] sm:$0xff]
    %v45 = vld [vmem:[%s0 + $0x50] sm:$0xff]
    %v46 = vld [vmem:[%s0 + $0x58] sm:$0xff]
    %v47 = vld [vmem:[%s0 + $0x60] sm:$0xff]
    %v48 = vld [vmem:[%s0 + $0x68] sm:$0xff]
    %v49 = vld [vmem:[%s0 + $0x70] sm:$0xff]
    %v50 = vld [vmem:[%s0 + $0x78] sm:$0xff]
    %v51 = vld [vmem:[#allocation2] sm:$0xff]
    %v52 = vld [vmem:[#allocation2 + $0x8] sm:$0xff]
    %v53 = vld [vmem:[#allocation2 + $0x10] sm:$0xff]
    %v54 = vld [vmem:[#allocation2 + $0x18] sm:$0xff]
    %v55 = vld [vmem:[#allocation2 + $0x20] sm:$0xff]
    %v56 = vld [vmem:[#allocation2 + $0x28] sm:$0xff]
    %v57 = vld [vmem:[#allocation2 + $0x30] sm:$0xff]
    %v58 = vld [vmem:[#allocation2 + $0x38] sm:$0xff]
    %v59 = vld [vmem:[#allocation2 + $0x40] sm:$0xff]
    %v60 = vld [vmem:[#allocation2 + $0x48] sm:$0xff]
    %v61 = vld [vmem:[#allocation2 + $0x50] sm:$0xff]
    %v62 = vld [vmem:[#allocation2 + $0x58] sm:$0xff]
    %v63 = vld [vmem:[#allocation2 + $0x60] sm:$0xff]
    %v64 = vld [vmem:[#allocation2 + $0x68] sm:$0xff]
    %v65 = vld [vmem:[#allocation2 + $0x70] sm:$0xff]
    %v66 = vld [vmem:[#allocation2 + $0x78] sm:$0xff]
    %v67 = vld [vmem:[#allocation2 + $0x80] sm:$0xff]
    %v68 = vld [vmem:[#allocation2 + $0x88] sm:$0xff]
    %v69 = vld [vmem:[#allocation2 + $0x90] sm:$0xff]
    %v70 = vld [vmem:[#allocation2 + $0x98] sm:$0xff]
    %v71 = vld [vmem:[#allocation2 + $0xa0] sm:$0xff]
    %v72 = vld [vmem:[#allocation2 + $0xa8] sm:$0xff]
    %v73 = vld [vmem:[#allocation2 + $0xb0] sm:$0xff]
    %v74 = vld [vmem:[#allocation2 + $0xb8] sm:$0xff]
    %v75 = vld [vmem:[#allocation2 + $0xc0] sm:$0xff]
    %v76 = vld [vmem:[#allocation2 + $0xc8] sm:$0xff]
    %v77 = vld [vmem:[#allocation2 + $0xd0] sm:$0xff]
    %v78 = vld [vmem:[#allocation2 + $0xd8] sm:$0xff]
    %v79 = vld [vmem:[#allocation2 + $0xe0] sm:$0xff]
    %v80 = vld [vmem:[#allocation2 + $0xe8] sm:$0xff]
    %v81 = vld [vmem:[#allocation2 + $0xf0] sm:$0xff]
    %v82 = vld [vmem:[#allocation2 + $0xf8] sm:$0xff]
    %v83 = vld [vmem:[%s2] sm:$0x3]
    %v85 = vlaneseq
    %v86 = vshrl.u32 %v85, 7
    %v87 = vsub.s32 0, %v86
    %v88 = vrot.slane %v83, %v87
    %v89 = vlaneseq
    %v90 = vshrl.u32 %v89, 7
    %v91 = vsub.s32 1, %v90
    %v92 = vrot.slane %v83, %v91
    %95 = vmatprep.subr.mxu0 %v82
    %96 = vmatpush1.msra.mxu0 %v81
    %97 = vmatprep.subr.mxu0 %v80
    %98 = vmatpush1.msra.mxu0 %v79
    %99 = vmatprep.subr.mxu0 %v78
    %100 = vmatpush1.msra.mxu0 %v77
    %101 = vmatprep.subr.mxu0 %v76
    %102 = vmatpush1.msra.mxu0 %v75
    %103 = vmatprep.subr.mxu0 %v74
    %104 = vmatpush1.msra.mxu0 %v73
    %105 = vmatprep.subr.mxu0 %v72
    %106 = vmatpush1.msra.mxu0 %v71
    %107 = vmatprep.subr.mxu0 %v70
    %108 = vmatpush1.msra.mxu0 %v69
    %109 = vmatprep.subr.mxu0 %v68
    %110 = vmatpush1.msra.mxu0 %v67
    %111 = vmatprep.subr.mxu0 %v66
    %112 = vmatpush1.msra.mxu0 %v65
    %113 = vmatprep.subr.mxu0 %v64
    %114 = vmatpush1.msra.mxu0 %v63
    %115 = vmatprep.subr.mxu0 %v62
    %116 = vmatpush1.msra.mxu0 %v61
    %117 = vmatprep.subr.mxu0 %v60
    %118 = vmatpush1.msra.mxu0 %v59
    %119 = vmatprep.subr.mxu0 %v58
    %120 = vmatpush1.msra.mxu0 %v57
    %121 = vmatprep.subr.mxu0 %v56
    %122 = vmatpush1.msra.mxu0 %v55
    %123 = vmatprep.subr.mxu0 %v54
    %124 = vmatpush1.msra.mxu0 %v53
    %125 = vmatprep.subr.mxu0 %v52
    %126 = vmatpush1.msra.mxu0 %v51
    %127 = vmatprep.subr.mxu0 0.0
    %128 = vmatpush2.msra.mxu0 0.0
    %129 = vmatprep.subr.mxu0 0.0
    %130 = vmatpush2.msra.mxu0 0.0
    %131 = vmatprep.subr.mxu0 0.0
    %132 = vmatpush2.msra.mxu0 0.0
    %133 = vmatprep.subr.mxu0 0.0
    %134 = vmatpush2.msra.mxu0 0.0
    %135 = vmatprep.subr.mxu0 0.0
    %136 = vmatpush2.msra.mxu0 0.0
    %137 = vmatprep.subr.mxu0 0.0
    %138 = vmatpush2.msra.mxu0 0.0
    %139 = vmatprep.subr.mxu0 0.0
    %140 = vmatpush2.msra.mxu0 0.0
    %141 = vmatprep.subr.mxu0 0.0
    %142 = vmatpush2.msra.mxu0 0.0
    %143 = vmatprep.subr.mxu0 0.0
    %144 = vmatpush2.msra.mxu0 0.0
    %145 = vmatprep.subr.mxu0 0.0
    %146 = vmatpush2.msra.mxu0 0.0
    %147 = vmatprep.subr.mxu0 0.0
    %148 = vmatpush2.msra.mxu0 0.0
    %149 = vmatprep.subr.mxu0 0.0
    %150 = vmatpush2.msra.mxu0 0.0
    %151 = vmatprep.subr.mxu0 0.0
    %152 = vmatpush2.msra.mxu0 0.0
    %153 = vmatprep.subr.mxu0 0.0
    %154 = vmatpush2.msra.mxu0 0.0
    %155 = vmatprep.subr.mxu0 0.0
    %156 = vmatpush2.msra.mxu0 0.0
    %157 = vmatprep.subr.mxu0 0.0
    %158 = vmatpush2.msra.mxu0 0.0
    %159 = vmatprep.mubr.f32.mxu0 0.0
    %160 = vmatmul.mubr.f32.gmra.mxu0 %v35
    %v161 = vpop.f32.mrf.mxu0
    %v162 = vadd.f32 %v88, %v161
    %v163 = vpop.f32.mrf.mxu0
    %v164 = vadd.f32 %v92, %v163
    %165 = vmatprep.mubr.f32.mxu0 0.0
    %166 = vmatmul.mubr.f32.gmra.mxu0 %v36
    %v167 = vpop.f32.mrf.mxu0
    %v168 = vadd.f32 %v88, %v167
    %v169 = vpop.f32.mrf.mxu0
    %v170 = vadd.f32 %v92, %v169
    %171 = vmatprep.mubr.f32.mxu0 0.0
    %172 = vmatmul.mubr.f32.gmra.mxu0 %v37
    %v173 = vpop.f32.mrf.mxu0
    %v174 = vadd.f32 %v88, %v173
    %v175 = vpop.f32.mrf.mxu0
    %v176 = vadd.f32 %v92, %v175
    %177 = vmatprep.mubr.f32.mxu0 0.0
    %178 = vmatmul.mubr.f32.gmra.mxu0 %v38
    %v179 = vpop.f32.mrf.mxu0
    %v180 = vadd.f32 %v88, %v179
    %v181 = vpop.f32.mrf.mxu0
    %v182 = vadd.f32 %v92, %v181
    %183 = vmatprep.mubr.f32.mxu0 0.0
    %184 = vmatmul.mubr.f32.gmra.mxu0 %v39
    %v185 = vpop.f32.mrf.mxu0
    %v186 = vadd.f32 %v88, %v185
    %v187 = vpop.f32.mrf.mxu0
    %v188 = vadd.f32 %v92, %v187
    %189 = vmatprep.mubr.f32.mxu0 0.0
    %190 = vmatmul.mubr.f32.gmra.mxu0 %v40
    %v191 = vpop.f32.mrf.mxu0
    %v192 = vadd.f32 %v88, %v191
    %v193 = vpop.f32.mrf.mxu0
    %v194 = vadd.f32 %v92, %v193
    %195 = vmatprep.mubr.f32.mxu0 0.0
    %196 = vmatmul.mubr.f32.gmra.mxu0 %v41
    %v197 = vpop.f32.mrf.mxu0
    %v198 = vadd.f32 %v88, %v197
    %v199 = vpop.f32.mrf.mxu0
    %v200 = vadd.f32 %v92, %v199
    %201 = vmatprep.mubr.f32.mxu0 0.0
    %202 = vmatmul.mubr.f32.gmra.mxu0 %v42
    %v203 = vpop.f32.mrf.mxu0
    %v204 = vadd.f32 %v88, %v203
    %v205 = vpop.f32.mrf.mxu0
    %v206 = vadd.f32 %v92, %v205
    %207 = vmatprep.mubr.f32.mxu0 0.0
    %208 = vmatmul.mubr.f32.gmra.mxu0 %v43
    %v209 = vpop.f32.mrf.mxu0
    %v210 = vadd.f32 %v88, %v209
    %v211 = vpop.f32.mrf.mxu0
    %v212 = vadd.f32 %v92, %v211
    %213 = vmatprep.mubr.f32.mxu0 0.0
    %214 = vmatmul.mubr.f32.gmra.mxu0 %v44
    %v215 = vpop.f32.mrf.mxu0
    %v216 = vadd.f32 %v88, %v215
    %v217 = vpop.f32.mrf.mxu0
    %v218 = vadd.f32 %v92, %v217
    %219 = vmatprep.mubr.f32.mxu0 0.0
    %220 = vmatmul.mubr.f32.gmra.mxu0 %v45
    %v221 = vpop.f32.mrf.mxu0
    %v222 = vadd.f32 %v88, %v221
    %v223 = vpop.f32.mrf.mxu0
    %v224 = vadd.f32 %v92, %v223
    %225 = vmatprep.mubr.f32.mxu0 0.0
    %226 = vmatmul.mubr.f32.gmra.mxu0 %v46
    %v227 = vpop.f32.mrf.mxu0
    %v228 = vadd.f32 %v88, %v227
    %v229 = vpop.f32.mrf.mxu0
    %v230 = vadd.f32 %v92, %v229
    %231 = vmatprep.mubr.f32.mxu0 0.0
    %232 = vmatmul.mubr.f32.gmra.mxu0 %v47
    %v233 = vpop.f32.mrf.mxu0
    %v234 = vadd.f32 %v88, %v233
    %v235 = vpop.f32.mrf.mxu0
    %v236 = vadd.f32 %v92, %v235
    %237 = vmatprep.mubr.f32.mxu0 0.0
    %238 = vmatmul.mubr.f32.gmra.mxu0 %v48
    %v239 = vpop.f32.mrf.mxu0
    %v240 = vadd.f32 %v88, %v239
    %v241 = vpop.f32.mrf.mxu0
    %v242 = vadd.f32 %v92, %v241
    %243 = vmatprep.mubr.f32.mxu0 0.0
    %244 = vmatmul.mubr.f32.gmra.mxu0 %v49
    %v245 = vpop.f32.mrf.mxu0
    %v246 = vadd.f32 %v88, %v245
    %v247 = vpop.f32.mrf.mxu0
    %v248 = vadd.f32 %v92, %v247
    %249 = vmatprep.mubr.f32.mxu0 0.0
    %250 = vmatmul.mubr.f32.gmra.mxu0 %v50
    %v251 = vpop.f32.mrf.mxu0
    %v252 = vadd.f32 %v88, %v251
    %v253 = vpop.f32.mrf.mxu0
    %v254 = vadd.f32 %v92, %v253
    %255 = vdwg.mxu0
    %v256 = vld [vmem:[%s4] sm:$0xff]
    %v257 = vld [vmem:[%s4 + $0x8] sm:$0xff]
    %v258 = vld [vmem:[%s4 + $0x10] sm:$0xff]
    %v259 = vld [vmem:[%s4 + $0x18] sm:$0xff]
    %v260 = vld [vmem:[%s4 + $0x20] sm:$0xff]
    %v261 = vld [vmem:[%s4 + $0x28] sm:$0xff]
    %v262 = vld [vmem:[%s4 + $0x30] sm:$0xff]
    %v263 = vld [vmem:[%s4 + $0x38] sm:$0xff]
    %v264 = vld [vmem:[%s4 + $0x40] sm:$0xff]
    %v265 = vld [vmem:[%s4 + $0x48] sm:$0xff]
    %v266 = vld [vmem:[%s4 + $0x50] sm:$0xff]
    %v267 = vld [vmem:[%s4 + $0x58] sm:$0xff]
    %v268 = vld [vmem:[%s4 + $0x60] sm:$0xff]
    %v269 = vld [vmem:[%s4 + $0x68] sm:$0xff]
    %v270 = vld [vmem:[%s4 + $0x70] sm:$0xff]
    %v271 = vld [vmem:[%s4 + $0x78] sm:$0xff]
    %v272 = vld [vmem:[%s3] sm:$0x3]
    %274 = vset.pattern.permute.xlu0 0
    %275 = vperm.xlu0 %274, %v256
    %v276 = vpop.permute.xlu0 %275
    %279 = vset.pattern.permute.xlu0 0
    %280 = vperm.xlu0 %279, %v257
    %v281 = vpop.permute.xlu0 %280
    %284 = vset.pattern.permute.xlu0 0
    %285 = vperm.xlu0 %284, %v258
    %v286 = vpop.permute.xlu0 %285
    %289 = vset.pattern.permute.xlu0 0
    %290 = vperm.xlu0 %289, %v259
    %v291 = vpop.permute.xlu0 %290
    %294 = vset.pattern.permute.xlu0 0
    %295 = vperm.xlu0 %294, %v260
    %v296 = vpop.permute.xlu0 %295
    %299 = vset.pattern.permute.xlu0 0
    %300 = vperm.xlu0 %299, %v261
    %v301 = vpop.permute.xlu0 %300
    %304 = vset.pattern.permute.xlu0 0
    %305 = vperm.xlu0 %304, %v262
    %v306 = vpop.permute.xlu0 %305
    %309 = vset.pattern.permute.xlu0 0
    %310 = vperm.xlu0 %309, %v263
    %v311 = vpop.permute.xlu0 %310
    %314 = vset.pattern.permute.xlu0 0
    %315 = vperm.xlu0 %314, %v264
    %v316 = vpop.permute.xlu0 %315
    %319 = vset.pattern.permute.xlu0 0
    %320 = vperm.xlu0 %319, %v265
    %v321 = vpop.permute.xlu0 %320
    %324 = vset.pattern.permute.xlu0 0
    %325 = vperm.xlu0 %324, %v266
    %v326 = vpop.permute.xlu0 %325
    %329 = vset.pattern.permute.xlu0 0
    %330 = vperm.xlu0 %329, %v267
    %v331 = vpop.permute.xlu0 %330
    %334 = vset.pattern.permute.xlu0 0
    %335 = vperm.xlu0 %334, %v268
    %v336 = vpop.permute.xlu0 %335
    %339 = vset.pattern.permute.xlu0 0
    %340 = vperm.xlu0 %339, %v269
    %v341 = vpop.permute.xlu0 %340
    %344 = vset.pattern.permute.xlu0 0
    %345 = vperm.xlu0 %344, %v270
    %v346 = vpop.permute.xlu0 %345
    %349 = vset.pattern.permute.xlu0 0
    %350 = vperm.xlu0 %349, %v271
    %v351 = vpop.permute.xlu0 %350
    %v354 = vlaneseq
    %v355 = vshrl.u32 %v354, 7
    %v356 = vsub.s32 0, %v355
    %v357 = vrot.slane %v272, %v356
    %v358 = vlaneseq
    %v359 = vshrl.u32 %v358, 7
    %v360 = vsub.s32 1, %v359
    %v361 = vrot.slane %v272, %v360
    %v364 = vmul.f32 %v276, %v357
    %v365 = vmul.f32 %v276, %v361
    %v366 = vmul.f32 %v281, %v357
    %v367 = vmul.f32 %v281, %v361
    %v368 = vmul.f32 %v286, %v357
    %v369 = vmul.f32 %v286, %v361
    %v370 = vmul.f32 %v291, %v357
    %v371 = vmul.f32 %v291, %v361
    %v372 = vmul.f32 %v296, %v357
    %v373 = vmul.f32 %v296, %v361
    %v374 = vmul.f32 %v301, %v357
    %v375 = vmul.f32 %v301, %v361
    %v376 = vmul.f32 %v306, %v357
    %v377 = vmul.f32 %v306, %v361
    %v378 = vmul.f32 %v311, %v357
    %v379 = vmul.f32 %v311, %v361
    %v380 = vmul.f32 %v316, %v357
    %v381 = vmul.f32 %v316, %v361
    %v382 = vmul.f32 %v321, %v357
    %v383 = vmul.f32 %v321, %v361
    %v384 = vmul.f32 %v326, %v357
    %v385 = vmul.f32 %v326, %v361
    %v386 = vmul.f32 %v331, %v357
    %v387 = vmul.f32 %v331, %v361
    %v388 = vmul.f32 %v336, %v357
    %v389 = vmul.f32 %v336, %v361
    %v390 = vmul.f32 %v341, %v357
    %v391 = vmul.f32 %v341, %v361
    %v392 = vmul.f32 %v346, %v357
    %v393 = vmul.f32 %v346, %v361
    %v394 = vmul.f32 %v351, %v357
    %v395 = vmul.f32 %v351, %v361
    %v396 = vadd.f32 %v162, %v364
    %v397 = vadd.f32 %v164, %v365
    %v398 = vadd.f32 %v168, %v366
    %v399 = vadd.f32 %v170, %v367
    %v400 = vadd.f32 %v174, %v368
    %v401 = vadd.f32 %v176, %v369
    %v402 = vadd.f32 %v180, %v370
    %v403 = vadd.f32 %v182, %v371
    %v404 = vadd.f32 %v186, %v372
    %v405 = vadd.f32 %v188, %v373
    %v406 = vadd.f32 %v192, %v374
    %v407 = vadd.f32 %v194, %v375
    %v408 = vadd.f32 %v198, %v376
    %v409 = vadd.f32 %v200, %v377
    %v410 = vadd.f32 %v204, %v378
    %v411 = vadd.f32 %v206, %v379
    %v412 = vadd.f32 %v210, %v380
    %v413 = vadd.f32 %v212, %v381
    %v414 = vadd.f32 %v216, %v382
    %v415 = vadd.f32 %v218, %v383
    %v416 = vadd.f32 %v222, %v384
    %v417 = vadd.f32 %v224, %v385
    %v418 = vadd.f32 %v228, %v386
    %v419 = vadd.f32 %v230, %v387
    %v420 = vadd.f32 %v234, %v388
    %v421 = vadd.f32 %v236, %v389
    %v422 = vadd.f32 %v240, %v390
    %v423 = vadd.f32 %v242, %v391
    %v424 = vadd.f32 %v246, %v392
    %v425 = vadd.f32 %v248, %v393
    %v426 = vadd.f32 %v252, %v394
    %v427 = vadd.f32 %v254, %v395
    %428 = vst [vmem:[#allocation5] sm:$0xff] %v396
    %429 = vst [vmem:[#allocation5 + $0x8] sm:$0xff] %v397
    %430 = vst [vmem:[#allocation5 + $0x10] sm:$0xff] %v398
    %431 = vst [vmem:[#allocation5 + $0x18] sm:$0xff] %v399
    %432 = vst [vmem:[#allocation5 + $0x20] sm:$0xff] %v400
    %433 = vst [vmem:[#allocation5 + $0x28] sm:$0xff] %v401
    %434 = vst [vmem:[#allocation5 + $0x30] sm:$0xff] %v402
    %435 = vst [vmem:[#allocation5 + $0x38] sm:$0xff] %v403
    %436 = vst [vmem:[#allocation5 + $0x40] sm:$0xff] %v404
    %437 = vst [vmem:[#allocation5 + $0x48] sm:$0xff] %v405
    %438 = vst [vmem:[#allocation5 + $0x50] sm:$0xff] %v406
    %439 = vst [vmem:[#allocation5 + $0x58] sm:$0xff] %v407
    %440 = vst [vmem:[#allocation5 + $0x60] sm:$0xff] %v408
    %441 = vst [vmem:[#allocation5 + $0x68] sm:$0xff] %v409
    %442 = vst [vmem:[#allocation5 + $0x70] sm:$0xff] %v410
    %443 = vst [vmem:[#allocation5 + $0x78] sm:$0xff] %v411
    %444 = vst [vmem:[#allocation5 + $0x80] sm:$0xff] %v412
    %445 = vst [vmem:[#allocation5 + $0x88] sm:$0xff] %v413
    %446 = vst [vmem:[#allocation5 + $0x90] sm:$0xff] %v414
    %447 = vst [vmem:[#allocation5 + $0x98] sm:$0xff] %v415
    %448 = vst [vmem:[#allocation5 + $0xa0] sm:$0xff] %v416
    %449 = vst [vmem:[#allocation5 + $0xa8] sm:$0xff] %v417
    %450 = vst [vmem:[#allocation5 + $0xb0] sm:$0xff] %v418
    %451 = vst [vmem:[#allocation5 + $0xb8] sm:$0xff] %v419
    %452 = vst [vmem:[#allocation5 + $0xc0] sm:$0xff] %v420
    %453 = vst [vmem:[#allocation5 + $0xc8] sm:$0xff] %v421
    %454 = vst [vmem:[#allocation5 + $0xd0] sm:$0xff] %v422
    %455 = vst [vmem:[#allocation5 + $0xd8] sm:$0xff] %v423
    %456 = vst [vmem:[#allocation5 + $0xe0] sm:$0xff] %v424
    %457 = vst [vmem:[#allocation5 + $0xe8] sm:$0xff] %v425
    %458 = vst [vmem:[#allocation5 + $0xf0] sm:$0xff] %v426
    %459 = vst [vmem:[#allocation5 + $0xf8] sm:$0xff] %v427
    // Predicated region
    $region26: #{tpu_custom_call.1} parent=1 // pred_check
      _
    $region27: #{tpu_custom_call.1} parent=1 // pred_check_branch
      %461 = sbr.rel (0) target = $region29
    $region28: #{tpu_custom_call.1} parent=1 // pred_region
      %s463 = ssub.s32 4096, 4096
      %464 = vsyncadd [#allocation4], %s463
      %s465 = sshll.u32 [#allocation5], 4
      %s466 = int_to_ptr.vmem [resolvable:$true] %s465
      %471 = dma.vmem_to_hbm [thread:$0]  %s466, 4096, %s5, [#allocation4], 256, 256, 16
    $region29: #{tpu_custom_call.1} parent=1 // pred_fallthru
      _
    // Predicated region
    $region30: #{tpu_custom_call.1} parent=1 // pred_check
      _
    $region31: #{tpu_custom_call.1} parent=1 // pred_check_branch
      %473 = sbr.rel (0) target = $region33
    $region32: #{tpu_custom_call.1} parent=1 // pred_region
      %474 = dma.done [#allocation4], 4096
    $region33: #{tpu_custom_call.1} parent=1 // pred_fallthru
      _
    %475 = vsyncpa [#allocation3], 1
    %476 = vsyncpa [#allocation4], 1

</llo_original>
